<compile_context>
chip_gen: v7x
topology: tpu7x:2x2x1
jax: 0.10.0
libtpu: 0.0.40
codegen_flags: <defaults>
</compile_context>

<pallas_src>
import math
import functools

import jax
import jax.numpy as jnp
from jax.experimental import pallas as pl
from jax.experimental.pallas import tpu as pltpu

# ---- AdaFace hyper-parameters (config.MODEL.HEAD.*), deterministic in-script ----
S = 64.0           # scale s
M = 0.4            # margin m
H = 0.333          # h
T_ALPHA = 0.01     # t_alpha
EPS = 1e-3         # self.eps
BATCH_MEAN0 = 20.0    # register_buffer batch_mean init
BATCH_STD0 = 100.0    # register_buffer batch_std init

_VMEM_BUDGET = 48 * 1024 * 1024   # conservative scoped-VMEM budget (fits v5e/v6e/v7x)


def adaface_kernel(labels_ref, scal_ref, invwn_ref, feat_ref, w_ref, out_ref):
    """One (tb, tc) logits tile: MXU contraction + cosine rescale + label-column select."""
    j = pl.program_id(1)                    # class-tile index

    f = feat_ref[...]                       # (TB, D)  compute dtype (bf16 or f32)
    w = w_ref[...]                          # (D, TC)  compute dtype
    tb = f.shape[0]
    tc = w.shape[1]

    # raw class-tile logits on the MXU (no pre-normalization, no transpose)
    raw = jax.lax.dot_general(
        f, w, dimension_numbers=(((1,), (0,)), ((), ())),
        preferred_element_type=jnp.float32)                           # (TB, TC) f32

    # cosine similarity: rescale with precomputed inverse norms, then clamp
    scal = scal_ref[...]                                              # (TB, 2) f32
    inv_fn = scal[:, 0:1]                                             # 1/||f||      (TB, 1)
    lab_val = scal[:, 1:2]                                            # label logit  (TB, 1)
    inv_wn = invwn_ref[...]                                           # 1/||w_c||    (1, TC)
    c = jnp.clip(raw * inv_fn * inv_wn, -1.0 + EPS, 1.0 - EPS)        # (TB, TC)

    # one-hot label mask for this class tile (tile offset folded into the compare).
    # Non-label columns have zero margin and |c| <= 1-eps, so cos(clip(acos(c))) == c
    # exactly: only the label column needs the precomputed corrected value.
    rel_label = labels_ref[...] - j * tc                              # (TB, 1) int32
    col_ids = jax.lax.broadcasted_iota(jnp.int32, (tb, tc), 1)
    onehot = col_ids == rel_label                                     # (TB, TC) bool

    out_ref[...] = (S * jnp.where(onehot, lab_val, c)).astype(out_ref.dtype)


def _vmem_bytes(tb, tc, D, itemsize):
    """Estimate of double-buffered VMEM usage for the chosen tiles."""
    return (2 * D * tc * itemsize          # weight class-tile
            + 2 * tb * D * itemsize        # feature batch-tile
            + 2 * tb * tc * 4              # f32 output tile
            + 2 * 8 * tc * 4               # (1, tc) inverse weight norms (sublane-padded)
            + 4 * 8 * 128 * 4)             # labels + packed scalars (padded small tiles)


@functools.partial(jax.jit, static_argnames=("tc", "tb", "compute_dtype", "out_dtype"))
def adaface_head(features, labels, weight, *, tc=2048, tb=256,
                 compute_dtype=jnp.bfloat16, out_dtype=jnp.float32):
    """AdaFace forward. `compute_dtype` controls the streamed weight / MXU operand dtype
    (bf16 default halves HBM traffic; use jnp.float32 for bit-faithful logits)."""
    B, D = features.shape
    C, D2 = weight.shape
    assert D2 == D

    itemsize = jnp.dtype(compute_dtype).itemsize
    tc = min(tc, C)
    tb = min(tb, B)
    # shrink tiles if the double-buffered estimate would blow the VMEM budget
    while _vmem_bytes(tb, tc, D, itemsize) > _VMEM_BUDGET and tc > 512 and (C % (tc // 2) == 0):
        tc //= 2
    while _vmem_bytes(tb, tc, D, itemsize) > _VMEM_BUDGET and tb > 64 and (B % (tb // 2) == 0):
        tb //= 2
    assert C % tc == 0 and (tc % 128 == 0 or tc == C), (C, tc)
    assert B % tb == 0 and (tb % 8 == 0 or tb == B), (B, tb)
    est = _vmem_bytes(tb, tc, D, itemsize)
    vmem_limit = int(min(_VMEM_BUDGET, max(32 * 1024 * 1024, est + est // 4)))

    # ---- batch statistics & margin vectors: computed ONCE here, not per class tile ----
    f32 = features.astype(jnp.float32)
    norms = jnp.sqrt(jnp.sum(f32 * f32, axis=1, keepdims=True))       # (B, 1)
    inv_fnorm = 1.0 / jnp.maximum(norms, 1e-12)
    safe_norms = jnp.clip(norms, 1e-3, 100.0)
    mean = jnp.mean(safe_norms)
    std = jnp.std(safe_norms, ddof=1)                                 # torch.std (unbiased); NaN if B == 1, same as torch
    batch_mean = mean * T_ALPHA + (1.0 - T_ALPHA) * BATCH_MEAN0
    batch_std = std * T_ALPHA + (1.0 - T_ALPHA) * BATCH_STD0
    # TODO(synk): batch_mean / batch_std EMA buffer mutation is not persisted (stateless kernel).
    margin_scaler = jnp.clip((safe_norms - batch_mean) / (batch_std + EPS) * H, -1.0, 1.0)
    g_angular = -M * margin_scaler                                    # (B, 1)
    g_add = M + M * margin_scaler                                     # (B, 1)

    # ---- quantized MXU operands (transpose/cast once; in a real model store the
    #      parameter in this (D, C)/compute_dtype layout to avoid the per-call pass) ----
    w32 = weight.astype(jnp.float32)
    feats_q = f32.astype(compute_dtype)                               # (B, D)
    w_t = w32.T.astype(compute_dtype)                                 # (D, C)

    # ---- per-class inverse weight norms, precomputed from the quantized weight ----
    wq32 = w_t.astype(jnp.float32).T                                  # (C, D) f32 after quantization
    wnorms = jnp.sqrt(jnp.sum(wq32 * wq32, axis=1))                   # (C,)
    inv_wnorm = 1.0 / jnp.maximum(wnorms, 1e-12)                      # (C,)
    inv_wnorm2d = inv_wnorm.reshape(1, C).astype(jnp.float32)

    # ---- label-column logit, computed ONCE in the wrapper with exact acos/cos ----
    fq32 = feats_q.astype(jnp.float32)
    w_lab = wq32[labels]                                              # (B, D) gather
    raw_lab = jnp.sum(fq32 * w_lab, axis=1, keepdims=True)            # (B, 1)
    c_lab = jnp.clip(raw_lab * inv_fnorm * inv_wnorm[labels][:, None],
                     -1.0 + EPS, 1.0 - EPS)
    theta_ma = jnp.clip(jnp.arccos(c_lab) + g_angular, EPS, math.pi - EPS)
    lab_val = jnp.cos(theta_ma) - g_add                               # (B, 1)

    labels2d = labels.reshape(B, 1).astype(jnp.int32)
    scalars = jnp.concatenate([inv_fnorm, lab_val], axis=1).astype(jnp.float32)   # (B, 2)

    return pl.pallas_call(
        adaface_kernel,
        out_shape=jax.ShapeDtypeStruct((B, C), out_dtype),
        grid_spec=pltpu.PrefetchScalarGridSpec(
            num_scalar_prefetch=0,
            grid=(B // tb, C // tc),
            in_specs=[
                pl.BlockSpec((tb, 1), lambda i, j: (i, 0)),    # labels
                pl.BlockSpec((tb, 2), lambda i, j: (i, 0)),    # packed [1/||f||, lab_val]
                pl.BlockSpec((1, tc), lambda i, j: (0, j)),    # 1/||w_c|| class-tile
                pl.BlockSpec((tb, D), lambda i, j: (i, 0)),    # feature batch-tile
                pl.BlockSpec((D, tc), lambda i, j: (0, j)),    # weight class-tile (D, TC)
            ],
            out_specs=pl.BlockSpec((tb, tc), lambda i, j: (i, j)),
        ),
        compiler_params=pltpu.CompilerParams(
            dimension_semantics=("parallel", "parallel"),
            vmem_limit_bytes=vmem_limit),
    )(labels2d, scalars, inv_wnorm2d, feats_q, w_t)


def adaface_ref(features, labels, weight, compute_dtype=jnp.float32):
    """Pure-JAX reference. compute_dtype=f32 reproduces the PyTorch forward exactly;
    compute_dtype=bf16 mirrors the kernel's quantization of the MXU operands
    (feature norms / margins always from f32 features, like the wrapper)."""
    C = weight.shape[0]
    f32 = features.astype(jnp.float32)
    w32 = weight.astype(jnp.float32)
    fq = f32.astype(compute_dtype).astype(jnp.float32)
    wq = w32.astype(compute_dtype).astype(jnp.float32)

    norms = jnp.sqrt(jnp.sum(f32 * f32, axis=1))                      # (B,)
    wnorms = jnp.sqrt(jnp.sum(wq * wq, axis=1))                       # (C,)
    cos_theta = jnp.matmul(fq, wq.T, precision=jax.lax.Precision.HIGHEST)
    cos_theta = cos_theta / jnp.maximum(norms, 1e-12)[:, None] / jnp.maximum(wnorms, 1e-12)[None, :]
    cos_theta = jnp.clip(cos_theta, -1.0 + EPS, 1.0 - EPS)

    safe_norms = jnp.clip(norms, 1e-3, 100.0)
    mean = jnp.mean(safe_norms)
    std = jnp.std(safe_norms, ddof=1)
    batch_mean = mean * T_ALPHA + (1.0 - T_ALPHA) * BATCH_MEAN0
    batch_std = std * T_ALPHA + (1.0 - T_ALPHA) * BATCH_STD0
    margin_scaler = jnp.clip((safe_norms - batch_mean) / (batch_std + EPS) * H, -1.0, 1.0)
    g_angular = -M * margin_scaler
    g_add = M + M * margin_scaler

    onehot = jax.nn.one_hot(labels, C, dtype=jnp.float32)
    ma = onehot * g_angular[:, None]
    mc = onehot * g_add[:, None]
    theta = jnp.arccos(cos_theta)
    theta_ma = jnp.clip(theta + ma, EPS, math.pi - EPS)
    return S * (jnp.cos(theta_ma) - mc)


if __name__ == "__main__":
    B, D, C = 8, 32, 256   # batch, embedding_dim, num_classes

    key = jax.random.PRNGKey(0)
    kf, ks, kl, kw = jax.random.split(key, 4)

    # features with varying norms (so the margin scaler is exercised)
    features = (jax.random.normal(kf, (B, D), dtype=jnp.float32)
                * (1.0 + 5.0 * jax.random.uniform(ks, (B, 1), dtype=jnp.float32)))
    labels = jax.random.randint(kl, (B,), 0, C, dtype=jnp.int32)

    # xavier_uniform_ for weight (C, D): bound = sqrt(6 / (fan_in + fan_out))
    bound = math.sqrt(6.0 / (C + D))
    weight = jax.random.uniform(kw, (C, D), dtype=jnp.float32, minval=-bound, maxval=bound)

    # --- f32 path: bit-faithful to the PyTorch forward ---
    out_f32 = adaface_head(features, labels, weight, compute_dtype=jnp.float32)
    jax.block_until_ready(out_f32)
    ref_f32 = adaface_ref(features, labels, weight, compute_dtype=jnp.float32)
    assert out_f32.shape == (B, C) and out_f32.dtype == jnp.float32
    err_f32 = float(jnp.max(jnp.abs(out_f32 - ref_f32)))
    assert err_f32 < 1e-2, f"f32 path mismatch vs reference: max_err={err_f32}"

    # --- default bf16-streaming path: validated vs a reference with the same bf16
    #     quantization of the MXU operands (isolates the intentional quantization
    #     from kernel bugs), plus a loose sanity bound vs the exact f32 logits
    #     (S=64 amplifies bf16 cosine rounding). ---
    out_bf16 = adaface_head(features, labels, weight)
    jax.block_until_ready(out_bf16)
    ref_bf16 = adaface_ref(features, labels, weight, compute_dtype=jnp.bfloat16)
    assert out_bf16.shape == (B, C) and out_bf16.dtype == jnp.float32
    err_bf16 = float(jnp.max(jnp.abs(out_bf16 - ref_bf16)))
    assert err_bf16 < 2e-2, f"bf16 path mismatch vs bf16-quantized reference: max_err={err_bf16}"
    drift = float(jnp.max(jnp.abs(out_bf16 - ref_f32)))
    assert drift < 2.0, f"bf16 quantization drift unexpectedly large: {drift}"

    print("KERNEL_OK")
</pallas_src>

<mosaic_0001>
module attributes {stable_mosaic.version = 11 : i64} {
  func.func @adaface_kernel(%arg0: i32, %arg1: i32, %arg2: memref<8x1xi32, #tpu.memory_space<vmem>>, %arg3: memref<8x2xf32, #tpu.memory_space<vmem>>, %arg4: memref<1x256xf32, #tpu.memory_space<vmem>>, %arg5: memref<8x32xf32, #tpu.memory_space<vmem>>, %arg6: memref<32x256xf32, #tpu.memory_space<vmem>>, %arg7: memref<8x256xf32, #tpu.memory_space<vmem>>) attributes {dimension_semantics = [#tpu.dimension_semantics<parallel>, #tpu.dimension_semantics<parallel>], iteration_bounds = array<i64: 1, 1>, scalar_prefetch = 0 : i64, scratch_operands = 0 : i64, tpu.core_type = #tpu.core_type<tc>, window_params = [{transform_indices = @transform_0, window_bounds = array<i64: 8, 1>}, {transform_indices = @transform_1, window_bounds = array<i64: 8, 2>}, {transform_indices = @transform_2, window_bounds = array<i64: 1, 256>}, {transform_indices = @transform_3, window_bounds = array<i64: 8, 32>}, {transform_indices = @transform_4, window_bounds = array<i64: 32, 256>}, {transform_indices = @transform_5, window_bounds = array<i64: 8, 256>}]} {
    %c0 = arith.constant 0 : index
    %c0_0 = arith.constant 0 : index
    %0 = vector.load %arg5[%c0, %c0_0] : memref<8x32xf32, #tpu.memory_space<vmem>>, vector<8x32xf32>
    %c0_1 = arith.constant 0 : index
    %c0_2 = arith.constant 0 : index
    %1 = vector.load %arg6[%c0_1, %c0_2] : memref<32x256xf32, #tpu.memory_space<vmem>>, vector<32x256xf32>
    %cst = arith.constant dense<0.000000e+00> : vector<8x256xf32>
    %2 = tpu.matmul %0, %1, %cst {dimension_numbers = #tpu.dot_dimension_numbers<[1], [0], [0], [1], [0, 0, 1, 1], [], []>} : vector<8x32xf32>, vector<32x256xf32>, vector<8x256xf32> -> vector<8x256xf32>
    %c0_3 = arith.constant 0 : index
    %c0_4 = arith.constant 0 : index
    %3 = vector.load %arg3[%c0_3, %c0_4] : memref<8x2xf32, #tpu.memory_space<vmem>>, vector<8x2xf32>
    %4 = vector.extract_strided_slice %3 {offsets = [0, 0], sizes = [8, 1], strides = [1, 1]} : vector<8x2xf32> to vector<8x1xf32>
    %5 = vector.extract_strided_slice %3 {offsets = [0, 1], sizes = [8, 1], strides = [1, 1]} : vector<8x2xf32> to vector<8x1xf32>
    %c0_5 = arith.constant 0 : index
    %c0_6 = arith.constant 0 : index
    %6 = vector.load %arg4[%c0_5, %c0_6] : memref<1x256xf32, #tpu.memory_space<vmem>>, vector<1x256xf32>
    %7 = vector.broadcast %4 : vector<8x1xf32> to vector<8x256xf32>
    %8 = arith.mulf %2, %7 : vector<8x256xf32>
    %9 = vector.broadcast %6 : vector<1x256xf32> to vector<8x256xf32>
    %10 = arith.mulf %8, %9 : vector<8x256xf32>
    %cst_7 = arith.constant -9.990000e-01 : f32
    %cst_8 = arith.constant 9.990000e-01 : f32
    %11 = vector.broadcast %cst_7 : f32 to vector<8x256xf32>
    %12 = arith.maximumf %11, %10 : vector<8x256xf32>
    %13 = vector.broadcast %cst_8 : f32 to vector<8x256xf32>
    %14 = arith.minimumf %13, %12 : vector<8x256xf32>
    %c0_9 = arith.constant 0 : index
    %c0_10 = arith.constant 0 : index
    %15 = vector.load %arg2[%c0_9, %c0_10] : memref<8x1xi32, #tpu.memory_space<vmem>>, vector<8x1xi32>
    %c256_i32 = arith.constant 256 : i32
    %16 = arith.muli %arg1, %c256_i32 : i32
    %17 = vector.broadcast %16 : i32 to vector<8x1xi32>
    %18 = arith.subi %15, %17 : vector<8x1xi32>
    %19 = tpu.iota {dimensions = array<i32: 1>} : vector<8x256xi32>
    %20 = vector.broadcast %18 : vector<8x1xi32> to vector<8x256xi32>
    %21 = arith.cmpi eq, %19, %20 : vector<8x256xi32>
    %22 = vector.shape_cast %5 : vector<8x1xf32> to vector<8x1xf32>
    %23 = vector.broadcast %22 : vector<8x1xf32> to vector<8x256xf32>
    %24 = arith.select %21, %23, %14 : vector<8x256xi1>, vector<8x256xf32>
    %cst_11 = arith.constant 6.400000e+01 : f32
    %25 = vector.broadcast %cst_11 : f32 to vector<8x256xf32>
    %26 = arith.mulf %25, %24 : vector<8x256xf32>
    %c0_12 = arith.constant 0 : index
    %c0_13 = arith.constant 0 : index
    %27 = vector.load %arg7[%c0_12, %c0_13] : memref<8x256xf32, #tpu.memory_space<vmem>>, vector<8x256xf32>
    tpu.vector_store %arg7[%c0_12, %c0_13], %26 {strides = array<i32>} : memref<8x256xf32, #tpu.memory_space<vmem>>, vector<8x256xf32>,
    return
  }
  func.func @transform_0(%arg0: i32, %arg1: i32) -> (i32, i32) {
    %c0_i32 = arith.constant 0 : i32
    %c0_i32_0 = arith.constant 0 : i32
    return %arg0, %c0_i32 : i32, i32
  }
  func.func @transform_1(%arg0: i32, %arg1: i32) -> (i32, i32) {
    %c0_i32 = arith.constant 0 : i32
    %c0_i32_0 = arith.constant 0 : i32
    return %arg0, %c0_i32 : i32, i32
  }
  func.func @transform_2(%arg0: i32, %arg1: i32) -> (i32, i32) {
    %c0_i32 = arith.constant 0 : i32
    %c0_i32_0 = arith.constant 0 : i32
    return %c0_i32, %arg1 : i32, i32
  }
  func.func @transform_3(%arg0: i32, %arg1: i32) -> (i32, i32) {
    %c0_i32 = arith.constant 0 : i32
    %c0_i32_0 = arith.constant 0 : i32
    return %arg0, %c0_i32 : i32, i32
  }
  func.func @transform_4(%arg0: i32, %arg1: i32) -> (i32, i32) {
    %c0_i32 = arith.constant 0 : i32
    %c0_i32_0 = arith.constant 0 : i32
    return %c0_i32, %arg1 : i32, i32
  }
  func.func @transform_5(%arg0: i32, %arg1: i32) -> (i32, i32) {
    %c0_i32 = arith.constant 0 : i32
    return %arg0, %arg1 : i32, i32
  }
}

</mosaic_0001>

<llo_original>
// kernel: adaface_head.1
$region0: #{adaface_head.1}
  #allocation0 [shape = 'u32[]', space=smem, size = 0x4, offset = 0x4, fixed_abs, tag = 'smem constant byte address 0x4 - core index']
  #allocation1 [shape = 'u32[144,128]{1,0:T(1,128)}', space=vmem, size = 0x12000, scoped, tag = 'internal scratch']
  %s0 = inlined_call_operand.vmem [shape: s32[8,1], index: 0, kind: input, shape index: {}]
  %s1 = inlined_call_operand.vmem [shape: f32[8,2], index: 1, kind: input, shape index: {}]
  %s2 = inlined_call_operand.vmem [shape: f32[1,256], index: 2, kind: input, shape index: {}]
  %s3 = inlined_call_operand.vmem [shape: f32[8,32], index: 3, kind: input, shape index: {}]
  %s4 = inlined_call_operand.vmem [shape: f32[32,256], index: 4, kind: input, shape index: {}]
  %s5 = inlined_call_operand.hbm [shape: f32[8,256], index: 5, kind: output, shape index: {}]
  %s6 = sld [smem:[#allocation0]]
  $region30: #{adaface_head.1} parent=0
    _
  %s8 = ssub.s32 1, %s6
  %s9 = scalar_select 0, %s8, %s6
  $region1: #{adaface_head.1} parent=0
    #allocation2 [shape = 'u8[8192]{0}', space=vmem, size = 0x2000, scoped, tag = 'output window, operand 0, single buffered']
    #allocation3 [shape = 's32[1]{0}', space=sflag, size = 0x4, scoped, tag = 'scoped memory for adaface_head.1']
    %10 = vsyncpa [#allocation3], 0
    // Predicated region
    $region2: #{adaface_head.1} parent=1 // pred_check
      _
    $region3: #{adaface_head.1} parent=1 // pred_check_branch
      %12 = sbr.rel (0) target = $region5
    $region4: #{adaface_head.1} parent=1 // pred_region
      _
    $region5: #{adaface_head.1} parent=1 // pred_fallthru
      _
    // Predicated region
    $region6: #{adaface_head.1} parent=1 // pred_check
      _
    $region7: #{adaface_head.1} parent=1 // pred_check_branch
      %14 = sbr.rel (0) target = $region9
    $region8: #{adaface_head.1} parent=1 // pred_region
      _
    $region9: #{adaface_head.1} parent=1 // pred_fallthru
      _
    // Predicated region
    $region10: #{adaface_head.1} parent=1 // pred_check
      _
    $region11: #{adaface_head.1} parent=1 // pred_check_branch
      %16 = sbr.rel (0) target = $region13
    $region12: #{adaface_head.1} parent=1 // pred_region
      _
    $region13: #{adaface_head.1} parent=1 // pred_fallthru
      _
    // Predicated region
    $region14: #{adaface_head.1} parent=1 // pred_check
      _
    $region15: #{adaface_head.1} parent=1 // pred_check_branch
      %18 = sbr.rel (0) target = $region17
    $region16: #{adaface_head.1} parent=1 // pred_region
      _
    $region17: #{adaface_head.1} parent=1 // pred_fallthru
      _
    // Predicated region
    $region18: #{adaface_head.1} parent=1 // pred_check
      _
    $region19: #{adaface_head.1} parent=1 // pred_check_branch
      %20 = sbr.rel (0) target = $region21
    $region20: #{adaface_head.1} parent=1 // pred_region
      _
    $region21: #{adaface_head.1} parent=1 // pred_fallthru
      _
    %v21 = vld [vmem:[%s3] sm:$0xff]
    %v22 = vld [vmem:[%s4] sm:$0xff]
    %v23 = vld [vmem:[%s4 + $0x8] sm:$0xff]
    %v24 = vld [vmem:[%s4 + $0x10] sm:$0xff]
    %v25 = vld [vmem:[%s4 + $0x18] sm:$0xff]
    %v26 = vld [vmem:[%s4 + $0x20] sm:$0xff]
    %v27 = vld [vmem:[%s4 + $0x28] sm:$0xff]
    %v28 = vld [vmem:[%s4 + $0x30] sm:$0xff]
    %v29 = vld [vmem:[%s4 + $0x38] sm:$0xff]
    %vm30 = vcmask 261120
    %v32 = vsel %vm30, %v21, 0
    %34 = vmatprep.subr.mxu0 %v23
    %35 = vmatpush1.msra.mxu0 %v22
    %36 = vmatprep.subr.mxu0 %v25
    %37 = vmatpush1.msra.mxu0 %v24
    %38 = vmatprep.subr.mxu0 %v27
    %39 = vmatpush1.msra.mxu0 %v26
    %40 = vmatprep.subr.mxu0 %v29
    %41 = vmatpush1.msra.mxu0 %v28
    %42 = vmatprep.subr.mxu0 0.0
    %43 = vmatpush1.msra.mxu0 0.0
    %44 = vmatprep.subr.mxu0 0.0
    %45 = vmatpush1.msra.mxu0 0.0
    %46 = vmatprep.subr.mxu0 0.0
    %47 = vmatpush1.msra.mxu0 0.0
    %48 = vmatprep.subr.mxu0 0.0
    %49 = vmatpush1.msra.mxu0 0.0
    %50 = vmatprep.subr.mxu0 0.0
    %51 = vmatpush1.msra.mxu0 0.0
    %52 = vmatprep.subr.mxu0 0.0
    %53 = vmatpush1.msra.mxu0 0.0
    %54 = vmatprep.subr.mxu0 0.0
    %55 = vmatpush1.msra.mxu0 0.0
    %56 = vmatprep.subr.mxu0 0.0
    %57 = vmatpush1.msra.mxu0 0.0
    %58 = vmatprep.subr.mxu0 0.0
    %59 = vmatpush1.msra.mxu0 0.0
    %60 = vmatprep.subr.mxu0 0.0
    %61 = vmatpush1.msra.mxu0 0.0
    %62 = vmatprep.subr.mxu0 0.0
    %63 = vmatpush1.msra.mxu0 0.0
    %64 = vmatprep.subr.mxu0 0.0
    %65 = vmatpush1.msra.mxu0 0.0
    %66 = vmatprep.subr.mxu0 0.0
    %67 = vmatpush1.msra.mxu0 0.0
    %68 = vmatprep.subr.mxu0 0.0
    %69 = vmatpush1.msra.mxu0 0.0
    %70 = vmatprep.subr.mxu0 0.0
    %71 = vmatpush1.msra.mxu0 0.0
    %72 = vmatprep.subr.mxu0 0.0
    %73 = vmatpush1.msra.mxu0 0.0
    %74 = vmatprep.subr.mxu0 0.0
    %75 = vmatpush1.msra.mxu0 0.0
    %76 = vmatprep.subr.mxu0 0.0
    %77 = vmatpush1.msra.mxu0 0.0
    %78 = vmatprep.subr.mxu0 0.0
    %79 = vmatpush1.msra.mxu0 0.0
    %80 = vmatprep.subr.mxu0 0.0
    %81 = vmatpush1.msra.mxu0 0.0
    %82 = vmatprep.subr.mxu0 0.0
    %83 = vmatpush1.msra.mxu0 0.0
    %84 = vmatprep.subr.mxu0 0.0
    %85 = vmatpush1.msra.mxu0 0.0
    %86 = vmatprep.subr.mxu0 0.0
    %87 = vmatpush1.msra.mxu0 0.0
    %88 = vmatprep.subr.mxu0 0.0
    %89 = vmatpush1.msra.mxu0 0.0
    %90 = vmatprep.subr.mxu0 0.0
    %91 = vmatpush1.msra.mxu0 0.0
    %92 = vmatprep.subr.mxu0 0.0
    %93 = vmatpush1.msra.mxu0 0.0
    %94 = vmatprep.subr.mxu0 0.0
    %95 = vmatpush1.msra.mxu0 0.0
    %96 = vmatprep.subr.mxu0 0.0
    %97 = vmatpush1.msra.mxu0 0.0
    %98 = vmatprep.mubr.f32.mxu0 0.0
    %99 = vmatmul.mubr.f32.gmra.mrb[0].mxu0 %v32
    %v100 = vpop.f32.mrb[0].mxu0
    %v101 = vadd.f32 0.0, %v100
    %v102 = vpop.f32.mrb[0].mxu0
    %v103 = vadd.f32 0.0, %v102
    %104 = vdwg.mxu0
    %v105 = vld [vmem:[%s1] sm:$0xff]
    %v106 = vld [vmem:[%s2] sm:$0x3]
    %108 = vset.pattern.permute.xlu0 0
    %109 = vperm.xlu0 %108, %v105
    %v110 = vpop.permute.xlu0 %109
    %v112 = vmul.f32 %v101, %v110
    %v113 = vmul.f32 %v103, %v110
    %v115 = vlaneseq
    %v116 = vshrl.u32 %v115, 7
    %v117 = vsub.s32 0, %v116
    %v118 = vrot.slane %v106, %v117
    %v119 = vlaneseq
    %v120 = vshrl.u32 %v119, 7
    %v121 = vsub.s32 1, %v120
    %v122 = vrot.slane %v106, %v121
    %v125 = vmul.f32 %v112, %v118
    %v126 = vmul.f32 %v113, %v122
    %v127 = vmax.f32 %v125, -0.999
    %v128 = vmax.f32 %v126, -0.999
    %v129 = vmin.f32 %v127, 0.999
    %v130 = vmin.f32 %v128, 0.999
    %v131 = vld [vmem:[%s0] sm:$0xff]
    %s132 = smul.u32 0, 256
    %v133 = vstv %s132
    %v134 = vsub.s32 %v131, %v133
    %v135 = vlaneseq
    %v136 = vand.u32 %v135, 127
    %v137 = vadd.s32 %v136, 128
    %138 = vset.pattern.permute.xlu0 0
    %139 = vperm.xlu0 %138, %v134
    %v140 = vpop.permute.xlu0 %139
    %vm141 = vcmp.eq.s32.totalorder %v136, %v140
    %vm142 = vcmp.eq.s32.totalorder %v137, %v140
    %143 = vset.pattern.permute.xlu0 1
    %144 = vperm.xlu0 %143, %v105
    %v145 = vpop.permute.xlu0 %144
    %v147 = vsel %vm141, %v145, %v129
    %v148 = vsel %vm142, %v145, %v130
    %v149 = vmul.f32 %v147, 64.0
    %v150 = vmul.f32 %v148, 64.0
    %151 = vst [vmem:[#allocation2] sm:$0xff] %v149
    %152 = vst [vmem:[#allocation2 + $0x8] sm:$0xff] %v150
    // Predicated region
    $region22: #{adaface_head.1} parent=1 // pred_check
      _
    $region23: #{adaface_head.1} parent=1 // pred_check_branch
      %154 = sbr.rel (0) target = $region25
    $region24: #{adaface_head.1} parent=1 // pred_region
      %s156 = ssub.s32 256, 256
      %157 = vsyncadd [#allocation3], %s156
      %s159 = sshll.u32 [#allocation2], 4
      %s160 = int_to_ptr.vmem [resolvable:$true] %s159
      %162 = dma.vmem_to_hbm [thread:$0]  %s160, 256, %s5, [#allocation3]
    $region25: #{adaface_head.1} parent=1 // pred_fallthru
      _
    // Predicated region
    $region26: #{adaface_head.1} parent=1 // pred_check
      _
    $region27: #{adaface_head.1} parent=1 // pred_check_branch
      %164 = sbr.rel (0) target = $region29
    $region28: #{adaface_head.1} parent=1 // pred_region
      %165 = dma.done [#allocation3], 256
    $region29: #{adaface_head.1} parent=1 // pred_fallthru
      _
    %166 = vsyncpa [#allocation3], 1

</llo_original>
